<compile_context>
chip_gen: v5e
topology: v5e:2x2
jax: 0.10.0
libtpu: 0.0.40
codegen_flags: <defaults>
</compile_context>

<pallas_src>
import functools

import jax
import jax.numpy as jnp
from jax.experimental import pallas as pl
from jax.experimental.pallas import tpu as pltpu


# ---------------------------------------------------------------------------
# Helpers
# ---------------------------------------------------------------------------
def _round_up(x, m):
    return (x + m - 1) // m * m


def _vmem_capacity_bytes():
    """Per-core VMEM capacity for the current TPU generation."""
    kind = ""
    try:
        kind = jax.devices()[0].device_kind.lower()
    except Exception:
        pass
    if "v2" in kind or "v3" in kind:
        return 16 << 20
    if "7" in kind:          # v7x: 64 MiB per TensorCore
        return 64 << 20
    return 128 << 20         # v4 / v5e / v6e


def _pick_batch_tile(b):
    """>=2 batch tiles when the batch allows it (both TensorCores on v7x)."""
    if b >= 16:
        return min(128, _round_up((b + 1) // 2, 8))
    return _round_up(max(b, 1), 8)


def _pick_adj_tile(n_adjs, n_nouns, tb, out_itemsize, budget_bytes):
    """Cross block is (tb, ta, n_nouns); TA == padded n_adjs (single tile) or
    a multiple of 128 (aligned lane slicing / (8,128)-safe second-minor dim)."""
    na8 = _round_up(n_adjs, 8)
    if tb * na8 * n_nouns * out_itemsize <= budget_bytes:
        return na8, na8
    ta = (budget_bytes // (tb * n_nouns * out_itemsize)) // 128 * 128
    ta = max(128, ta)
    return ta, _round_up(n_adjs, ta)


# ---------------------------------------------------------------------------
# Fused kernel: backbone stand-in + adj/noun head + cross_multiply tile
# ---------------------------------------------------------------------------
def fused_cross_tagger_kernel(pooled_ref, w_trunk_ref, b_trunk_ref, w_fc_ref,
                              b_fc_ref, w_head_ref, b_head_ref,
                              cross_ref, adj_ref, noun_ref,
                              *, n_adjs_pad, adj_tile, num_adj_tiles):
    a = pl.program_id(1)  # adj-tile index (inner, "arbitrary" axis)

    # Backbone stand-in + fused adj|noun head: once per batch tile.  The adj /
    # noun sigmoid outputs stay resident in VMEM across all adj tiles (their
    # out BlockSpecs are constant along the "arbitrary" axis).
    @pl.when(a == 0)
    def _():
        pooled = pooled_ref[...]                                    # (TB, C)
        trunk = jnp.dot(pooled, w_trunk_ref[...],
                        preferred_element_type=jnp.float32) + b_trunk_ref[...]
        trunk = jnp.maximum(trunk, 0.0)                             # (TB, F)
        h = jnp.dot(trunk.astype(w_fc_ref.dtype), w_fc_ref[...],
                    preferred_element_type=jnp.float32) + b_fc_ref[...]
        # adj_fc | noun_fc merged into one lane-dense matmul + one sigmoid.
        reps = jnp.dot(h.astype(w_head_ref.dtype), w_head_ref[...],
                       preferred_element_type=jnp.float32) + b_head_ref[...]
        probs = jax.nn.sigmoid(reps)                                # f32
        adj_ref[...] = probs[:, :n_adjs_pad]                        # (TB, Na)
        noun_ref[...] = probs[:, n_adjs_pad:]                       # (TB, Nn)

    # cross_multiply tile: adj lanes [a*TA, (a+1)*TA) x all nouns.
    if num_adj_tiles == 1:
        adj_blk = adj_ref[...]                                      # (TB, TA)
    else:
        start = pl.multiple_of(a * adj_tile, adj_tile)              # TA%128==0
        adj_blk = adj_ref[:, pl.ds(start, adj_tile)]                # VMEM read
    noun = noun_ref[...]                                            # (TB, Nn)
    cross_ref[...] = adj_blk[:, :, None] * noun[:, None, :]         # (TB,TA,Nn)


# ---------------------------------------------------------------------------
# Wrapper
# ---------------------------------------------------------------------------
@functools.partial(jax.jit, static_argnames=("compute_dtype",))
def cross_tagger_forward(x, params, compute_dtype=jnp.float32):
    """x: (B, C, H, W) float32.  Returns (cross_out, (adj_out, noun_out))."""
    B, C, H, W = x.shape
    F = params["w_trunk"].shape[1]
    HID = params["w_fc"].shape[1]
    n_adjs = params["w_adj"].shape[1]
    n_nouns = params["w_noun"].shape[1]

    # Global-average-pool outside the kernel (mem-bound either way).
    pooled = jnp.mean(x.reshape(B, C, H * W), axis=-1)              # (B, C)

    TB = _pick_batch_tile(B)
    B_pad = _round_up(B, TB)

    # VMEM-derived cross-block budget (cross block is double-buffered).
    wdt = jnp.dtype(compute_dtype).itemsize
    vmem_limit = int(_vmem_capacity_bytes() * 0.75)
    na8 = _round_up(n_adjs, 8)
    weight_bytes = (C * F + F * HID + HID * (na8 + n_nouns)) * wdt \
        + (F + HID + na8 + n_nouns) * 4
    fixed = (2 * weight_bytes + 2 * TB * C * wdt
             + 2 * TB * (na8 + n_nouns) * 4 + (2 << 20))
    cross_budget = min(16 << 20, max(1 << 20, (vmem_limit - fixed) // 2))
    TA, Na_pad = _pick_adj_tile(n_adjs, n_nouns, TB, 4, cross_budget)
    num_adj_tiles = Na_pad // TA

    if B_pad != B:
        pooled = jnp.pad(pooled, ((0, B_pad - B), (0, 0)))
    pooled = pooled.astype(compute_dtype)

    # Merge adj_fc / noun_fc weights into one lane-dense head matmul;
    # pad the adj columns to the tiled extent.
    w_adj, b_adj = params["w_adj"], params["b_adj"]
    if Na_pad != n_adjs:
        w_adj = jnp.pad(w_adj, ((0, 0), (0, Na_pad - n_adjs)))
        b_adj = jnp.pad(b_adj, ((0, Na_pad - n_adjs),))
    w_head = jnp.concatenate([w_adj, params["w_noun"]], axis=1).astype(compute_dtype)
    b_head = jnp.concatenate([b_adj, params["b_noun"]])[None, :].astype(jnp.float32)
    w_trunk = params["w_trunk"].astype(compute_dtype)
    w_fc = params["w_fc"].astype(compute_dtype)
    b_trunk = params["b_trunk"][None, :].astype(jnp.float32)
    b_fc = params["b_fc"][None, :].astype(jnp.float32)

    kernel = functools.partial(
        fused_cross_tagger_kernel,
        n_adjs_pad=Na_pad, adj_tile=TA, num_adj_tiles=num_adj_tiles)

    cost = pl.CostEstimate(
        flops=2 * B_pad * (C * F + F * HID + HID * (Na_pad + n_nouns))
        + B_pad * Na_pad * n_nouns,
        transcendentals=B_pad * (Na_pad + n_nouns),
        bytes_accessed=4 * B_pad * (Na_pad * n_nouns + Na_pad + n_nouns)
        + wdt * (B_pad * C + C * F + F * HID + HID * (Na_pad + n_nouns)))

    cross3d, adj_full, noun_out = pl.pallas_call(
        kernel,
        out_shape=(
            jax.ShapeDtypeStruct((B_pad, Na_pad, n_nouns), jnp.float32),
            jax.ShapeDtypeStruct((B_pad, Na_pad), jnp.float32),
            jax.ShapeDtypeStruct((B_pad, n_nouns), jnp.float32),
        ),
        grid_spec=pltpu.PrefetchScalarGridSpec(
            num_scalar_prefetch=0,
            grid=(B_pad // TB, num_adj_tiles),
            in_specs=[
                pl.BlockSpec((TB, C), lambda b, a: (b, 0)),
                pl.BlockSpec((C, F), lambda b, a: (0, 0)),
                pl.BlockSpec((1, F), lambda b, a: (0, 0)),
                pl.BlockSpec((F, HID), lambda b, a: (0, 0)),
                pl.BlockSpec((1, HID), lambda b, a: (0, 0)),
                pl.BlockSpec((HID, Na_pad + n_nouns), lambda b, a: (0, 0)),
                pl.BlockSpec((1, Na_pad + n_nouns), lambda b, a: (0, 0)),
            ],
            out_specs=(
                pl.BlockSpec((TB, TA, n_nouns), lambda b, a: (b, a, 0)),
                pl.BlockSpec((TB, Na_pad), lambda b, a: (b, 0)),
                pl.BlockSpec((TB, n_nouns), lambda b, a: (b, 0)),
            ),
        ),
        compiler_params=pltpu.CompilerParams(
            dimension_semantics=("parallel", "arbitrary"),
            vmem_limit_bytes=vmem_limit),
        cost_estimate=cost,
    )(pooled, w_trunk, b_trunk, w_fc, b_fc, w_head, b_head)

    # torch.flatten(start_dim=1): contiguous row-major reshape (free); padded
    # adj columns (if any) sit at the tail and are sliced off with the batch.
    cross_out = cross3d.reshape(B_pad, Na_pad * n_nouns)[:B, :n_adjs * n_nouns]
    return cross_out, (adj_full[:B, :n_adjs], noun_out[:B])


# ---------------------------------------------------------------------------
# Params + pure-JAX reference
# ---------------------------------------------------------------------------
def init_params(key, in_channels, trunk_feat, hidden, n_adjs, n_nouns):
    ks = jax.random.split(key, 8)
    s = 0.05
    return {
        "w_trunk": s * jax.random.normal(ks[0], (in_channels, trunk_feat), jnp.float32),
        "b_trunk": s * jax.random.normal(ks[1], (trunk_feat,), jnp.float32),
        "w_fc":    s * jax.random.normal(ks[2], (trunk_feat, hidden), jnp.float32),
        "b_fc":    s * jax.random.normal(ks[3], (hidden,), jnp.float32),
        "w_adj":   s * jax.random.normal(ks[4], (hidden, n_adjs), jnp.float32),
        "b_adj":   s * jax.random.normal(ks[5], (n_adjs,), jnp.float32),
        "w_noun":  s * jax.random.normal(ks[6], (hidden, n_nouns), jnp.float32),
        "b_noun":  s * jax.random.normal(ks[7], (n_nouns,), jnp.float32),
    }


def reference_forward(x, params):
    """Pure-JAX f32 reference of the same math (for correctness check)."""
    B, C, H, W = x.shape
    pooled = jnp.mean(x.reshape(B, C, H * W), axis=-1)
    trunk = jnp.maximum(pooled @ params["w_trunk"] + params["b_trunk"], 0.0)
    h = trunk @ params["w_fc"] + params["b_fc"]
    adj_out = jax.nn.sigmoid(h @ params["w_adj"] + params["b_adj"])
    noun_out = jax.nn.sigmoid(h @ params["w_noun"] + params["b_noun"])
    cross = jnp.einsum("di,dj->dij", adj_out, noun_out).reshape(B, -1)
    return cross, (adj_out, noun_out)


if __name__ == "__main__":
    keys = jax.random.split(jax.random.PRNGKey(0), 4)
    trunk_feat, hidden = 64, 32

    # --- Case 1: tiny f32 config (n_nouns not a multiple of 128) -----------
    B, C, H, W = 2, 4, 16, 16
    n_adjs, n_nouns = 8, 16
    x = jax.random.normal(keys[0], (B, C, H, W), jnp.float32)
    params = init_params(keys[1], C, trunk_feat, hidden, n_adjs, n_nouns)

    cross_out, (adj_out, noun_out) = cross_tagger_forward(x, params)
    jax.block_until_ready((cross_out, adj_out, noun_out))
    ref_cross, (ref_adj, ref_noun) = reference_forward(x, params)
    assert cross_out.shape == (B, n_adjs * n_nouns)
    assert adj_out.shape == (B, n_adjs) and noun_out.shape == (B, n_nouns)
    assert jnp.allclose(cross_out, ref_cross, atol=1e-5)
    assert jnp.allclose(adj_out, ref_adj, atol=1e-5)
    assert jnp.allclose(noun_out, ref_noun, atol=1e-5)

    # --- Case 2: bf16 compute, >=2 batch tiles, lane-dense cross stores ----
    B2, C2, H2, W2 = 32, 4, 8, 8
    n_adjs2, n_nouns2 = 20, 128          # n_adjs2 exercises the 8-padding path
    x2 = jax.random.normal(keys[2], (B2, C2, H2, W2), jnp.float32)
    params2 = init_params(keys[3], C2, trunk_feat, hidden, n_adjs2, n_nouns2)

    cross2, (adj2, noun2) = cross_tagger_forward(
        x2, params2, compute_dtype=jnp.bfloat16)
    jax.block_until_ready((cross2, adj2, noun2))
    ref_cross2, (ref_adj2, ref_noun2) = reference_forward(x2, params2)
    assert cross2.shape == (B2, n_adjs2 * n_nouns2)
    assert adj2.shape == (B2, n_adjs2) and noun2.shape == (B2, n_nouns2)
    assert jnp.allclose(cross2, ref_cross2, atol=1e-2)
    assert jnp.allclose(adj2, ref_adj2, atol=1e-2)
    assert jnp.allclose(noun2, ref_noun2, atol=1e-2)

    print("KERNEL_OK")
</pallas_src>

<mosaic_0001>
module attributes {stable_mosaic.version = 11 : i64} {
  func.func @fused_cross_tagger_kernel(%arg0: i32, %arg1: i32, %arg2: memref<8x4xf32, #tpu.memory_space<vmem>>, %arg3: memref<4x64xf32, #tpu.memory_space<vmem>>, %arg4: memref<1x64xf32, #tpu.memory_space<vmem>>, %arg5: memref<64x32xf32, #tpu.memory_space<vmem>>, %arg6: memref<1x32xf32, #tpu.memory_space<vmem>>, %arg7: memref<32x24xf32, #tpu.memory_space<vmem>>, %arg8: memref<1x24xf32, #tpu.memory_space<vmem>>, %arg9: memref<8x8x16xf32, #tpu.memory_space<vmem>>, %arg10: memref<8x8xf32, #tpu.memory_space<vmem>>, %arg11: memref<8x16xf32, #tpu.memory_space<vmem>>) attributes {dimension_semantics = [#tpu.dimension_semantics<parallel>, #tpu.dimension_semantics<arbitrary>], iteration_bounds = array<i64: 1, 1>, scalar_prefetch = 0 : i64, scratch_operands = 0 : i64, tpu.core_type = #tpu.core_type<tc>, window_params = [{transform_indices = @transform_0, window_bounds = array<i64: 8, 4>}, {pipeline_mode = #tpu.pipeline_mode<synchronous>, transform_indices = @transform_1, window_bounds = array<i64: 4, 64>}, {pipeline_mode = #tpu.pipeline_mode<synchronous>, transform_indices = @transform_2, window_bounds = array<i64: 1, 64>}, {pipeline_mode = #tpu.pipeline_mode<synchronous>, transform_indices = @transform_3, window_bounds = array<i64: 64, 32>}, {pipeline_mode = #tpu.pipeline_mode<synchronous>, transform_indices = @transform_4, window_bounds = array<i64: 1, 32>}, {pipeline_mode = #tpu.pipeline_mode<synchronous>, transform_indices = @transform_5, window_bounds = array<i64: 32, 24>}, {pipeline_mode = #tpu.pipeline_mode<synchronous>, transform_indices = @transform_6, window_bounds = array<i64: 1, 24>}, {transform_indices = @transform_7, window_bounds = array<i64: 8, 8, 16>}, {transform_indices = @transform_8, window_bounds = array<i64: 8, 8>}, {transform_indices = @transform_9, window_bounds = array<i64: 8, 16>}]} {
    %c0_i32 = arith.constant 0 : i32
    %0 = arith.cmpi eq, %arg1, %c0_i32 : i32
    %1 = arith.extui %0 : i1 to i32
    %c0_i32_0 = arith.constant 0 : i32
    %2 = arith.cmpi ne, %1, %c0_i32_0 : i32
    scf.if %2 {
      %c0_7 = arith.constant 0 : index
      %c0_8 = arith.constant 0 : index
      %11 = vector.load %arg2[%c0_7, %c0_8] : memref<8x4xf32, #tpu.memory_space<vmem>>, vector<8x4xf32>
      %c0_9 = arith.constant 0 : index
      %c0_10 = arith.constant 0 : index
      %12 = vector.load %arg3[%c0_9, %c0_10] : memref<4x64xf32, #tpu.memory_space<vmem>>, vector<4x64xf32>
      %cst = arith.constant dense<0.000000e+00> : vector<8x64xf32>
      %13 = tpu.matmul %11, %12, %cst {dimension_numbers = #tpu.dot_dimension_numbers<[1], [0], [0], [1], [0, 0, 1, 1], [], []>} : vector<8x4xf32>, vector<4x64xf32>, vector<8x64xf32> -> vector<8x64xf32>
      %c0_11 = arith.constant 0 : index
      %c0_12 = arith.constant 0 : index
      %14 = vector.load %arg4[%c0_11, %c0_12] : memref<1x64xf32, #tpu.memory_space<vmem>>, vector<1x64xf32>
      %15 = vector.broadcast %14 : vector<1x64xf32> to vector<8x64xf32>
      %16 = arith.addf %13, %15 : vector<8x64xf32>
      %cst_13 = arith.constant 0.000000e+00 : f32
      %17 = vector.broadcast %cst_13 : f32 to vector<8x64xf32>
      %18 = arith.maximumf %16, %17 : vector<8x64xf32>
      %c0_14 = arith.constant 0 : index
      %c0_15 = arith.constant 0 : index
      %19 = vector.load %arg5[%c0_14, %c0_15] : memref<64x32xf32, #tpu.memory_space<vmem>>, vector<64x32xf32>
      %cst_16 = arith.constant dense<0.000000e+00> : vector<8x32xf32>
      %20 = tpu.matmul %18, %19, %cst_16 {dimension_numbers = #tpu.dot_dimension_numbers<[1], [0], [0], [1], [0, 0, 1, 1], [], []>} : vector<8x64xf32>, vector<64x32xf32>, vector<8x32xf32> -> vector<8x32xf32>
      %c0_17 = arith.constant 0 : index
      %c0_18 = arith.constant 0 : index
      %21 = vector.load %arg6[%c0_17, %c0_18] : memref<1x32xf32, #tpu.memory_space<vmem>>, vector<1x32xf32>
      %22 = vector.broadcast %21 : vector<1x32xf32> to vector<8x32xf32>
      %23 = arith.addf %20, %22 : vector<8x32xf32>
      %c0_19 = arith.constant 0 : index
      %c0_20 = arith.constant 0 : index
      %24 = vector.load %arg7[%c0_19, %c0_20] : memref<32x24xf32, #tpu.memory_space<vmem>>, vector<32x24xf32>
      %cst_21 = arith.constant dense<0.000000e+00> : vector<8x24xf32>
      %25 = tpu.matmul %23, %24, %cst_21 {dimension_numbers = #tpu.dot_dimension_numbers<[1], [0], [0], [1], [0, 0, 1, 1], [], []>} : vector<8x32xf32>, vector<32x24xf32>, vector<8x24xf32> -> vector<8x24xf32>
      %c0_22 = arith.constant 0 : index
      %c0_23 = arith.constant 0 : index
      %26 = vector.load %arg8[%c0_22, %c0_23] : memref<1x24xf32, #tpu.memory_space<vmem>>, vector<1x24xf32>
      %27 = vector.broadcast %26 : vector<1x24xf32> to vector<8x24xf32>
      %28 = arith.addf %25, %27 : vector<8x24xf32>
      %29 = arith.negf %28 : vector<8x24xf32>
      %30 = math.exp %29 : vector<8x24xf32>
      %cst_24 = arith.constant 1.000000e+00 : f32
      %31 = vector.broadcast %cst_24 : f32 to vector<8x24xf32>
      %32 = arith.addf %31, %30 : vector<8x24xf32>
      %33 = arith.divf %31, %32 : vector<8x24xf32>
      %34 = vector.extract_strided_slice %33 {offsets = [0, 0], sizes = [8, 8], strides = [1, 1]} : vector<8x24xf32> to vector<8x8xf32>
      %c0_25 = arith.constant 0 : index
      %c0_26 = arith.constant 0 : index
      %35 = vector.load %arg10[%c0_25, %c0_26] : memref<8x8xf32, #tpu.memory_space<vmem>>, vector<8x8xf32>
      tpu.vector_store %arg10[%c0_25, %c0_26], %34 {strides = array<i32>} : memref<8x8xf32, #tpu.memory_space<vmem>>, vector<8x8xf32>,
      %36 = vector.extract_strided_slice %33 {offsets = [0, 8], sizes = [8, 16], strides = [1, 1]} : vector<8x24xf32> to vector<8x16xf32>
      %c0_27 = arith.constant 0 : index
      %c0_28 = arith.constant 0 : index
      %37 = vector.load %arg11[%c0_27, %c0_28] : memref<8x16xf32, #tpu.memory_space<vmem>>, vector<8x16xf32>
      tpu.vector_store %arg11[%c0_27, %c0_28], %36 {strides = array<i32>} : memref<8x16xf32, #tpu.memory_space<vmem>>, vector<8x16xf32>,
    } else {
    }
    %c0 = arith.constant 0 : index
    %c0_1 = arith.constant 0 : index
    %3 = vector.load %arg10[%c0, %c0_1] : memref<8x8xf32, #tpu.memory_space<vmem>>, vector<8x8xf32>
    %c0_2 = arith.constant 0 : index
    %c0_3 = arith.constant 0 : index
    %4 = vector.load %arg11[%c0_2, %c0_3] : memref<8x16xf32, #tpu.memory_space<vmem>>, vector<8x16xf32>
    %5 = vector.shape_cast %3 : vector<8x8xf32> to vector<8x8x1xf32>
    %6 = vector.shape_cast %4 : vector<8x16xf32> to vector<8x1x16xf32>
    %7 = vector.broadcast %5 : vector<8x8x1xf32> to vector<8x8x16xf32>
    %8 = vector.broadcast %6 : vector<8x1x16xf32> to vector<8x8x16xf32>
    %9 = arith.mulf %7, %8 : vector<8x8x16xf32>
    %c0_4 = arith.constant 0 : index
    %c0_5 = arith.constant 0 : index
    %c0_6 = arith.constant 0 : index
    %10 = vector.load %arg9[%c0_4, %c0_5, %c0_6] : memref<8x8x16xf32, #tpu.memory_space<vmem>>, vector<8x8x16xf32>
    tpu.vector_store %arg9[%c0_4, %c0_5, %c0_6], %9 {strides = array<i32>} : memref<8x8x16xf32, #tpu.memory_space<vmem>>, vector<8x8x16xf32>,
    return
  }
  func.func @transform_0(%arg0: i32, %arg1: i32) -> (i32, i32) {
    %c0_i32 = arith.constant 0 : i32
    %c0_i32_0 = arith.constant 0 : i32
    return %arg0, %c0_i32 : i32, i32
  }
  func.func @transform_1(%arg0: i32, %arg1: i32) -> (i32, i32) {
    %c0_i32 = arith.constant 0 : i32
    %c0_i32_0 = arith.constant 0 : i32
    %c0_i32_1 = arith.constant 0 : i32
    return %c0_i32, %c0_i32_0 : i32, i32
  }
  func.func @transform_2(%arg0: i32, %arg1: i32) -> (i32, i32) {
    %c0_i32 = arith.constant 0 : i32
    %c0_i32_0 = arith.constant 0 : i32
    %c0_i32_1 = arith.constant 0 : i32
    return %c0_i32, %c0_i32_0 : i32, i32
  }
  func.func @transform_3(%arg0: i32, %arg1: i32) -> (i32, i32) {
    %c0_i32 = arith.constant 0 : i32
    %c0_i32_0 = arith.constant 0 : i32
    %c0_i32_1 = arith.constant 0 : i32
    return %c0_i32, %c0_i32_0 : i32, i32
  }
  func.func @transform_4(%arg0: i32, %arg1: i32) -> (i32, i32) {
    %c0_i32 = arith.constant 0 : i32
    %c0_i32_0 = arith.constant 0 : i32
    %c0_i32_1 = arith.constant 0 : i32
    return %c0_i32, %c0_i32_0 : i32, i32
  }
  func.func @transform_5(%arg0: i32, %arg1: i32) -> (i32, i32) {
    %c0_i32 = arith.constant 0 : i32
    %c0_i32_0 = arith.constant 0 : i32
    %c0_i32_1 = arith.constant 0 : i32
    return %c0_i32, %c0_i32_0 : i32, i32
  }
  func.func @transform_6(%arg0: i32, %arg1: i32) -> (i32, i32) {
    %c0_i32 = arith.constant 0 : i32
    %c0_i32_0 = arith.constant 0 : i32
    %c0_i32_1 = arith.constant 0 : i32
    return %c0_i32, %c0_i32_0 : i32, i32
  }
  func.func @transform_7(%arg0: i32, %arg1: i32) -> (i32, i32, i32) {
    %c0_i32 = arith.constant 0 : i32
    %c0_i32_0 = arith.constant 0 : i32
    return %arg0, %arg1, %c0_i32 : i32, i32, i32
  }
  func.func @transform_8(%arg0: i32, %arg1: i32) -> (i32, i32) {
    %c0_i32 = arith.constant 0 : i32
    %c0_i32_0 = arith.constant 0 : i32
    return %arg0, %c0_i32 : i32, i32
  }
  func.func @transform_9(%arg0: i32, %arg1: i32) -> (i32, i32) {
    %c0_i32 = arith.constant 0 : i32
    %c0_i32_0 = arith.constant 0 : i32
    return %arg0, %c0_i32 : i32, i32
  }
}

</mosaic_0001>

<llo_original>
// kernel: cross_tagger_forward.1
$region0: #{cross_tagger_forward.1}
  #allocation0 [shape = 'u32[]', space=smem, size = 0x4, offset = 0x4, fixed_abs, tag = 'smem constant byte address 0x4 - core index']
  #allocation1 [shape = 'u32[72,128]{1,0:T(1,128)}', space=vmem, size = 0x9000, scoped, tag = 'internal scratch']
  %s0 = inlined_call_operand.vmem [shape: f32[8,4], index: 0, kind: input, shape index: {}]
  %s1 = inlined_call_operand.vmem [shape: f32[4,64], index: 1, kind: input, shape index: {}]
  %s2 = inlined_call_operand.vmem [shape: f32[1,64], index: 2, kind: input, shape index: {}]
  %s3 = inlined_call_operand.vmem [shape: f32[64,32], index: 3, kind: input, shape index: {}]
  %s4 = inlined_call_operand.vmem [shape: f32[1,32], index: 4, kind: input, shape index: {}]
  %s5 = inlined_call_operand.vmem [shape: f32[32,24], index: 5, kind: input, shape index: {}]
  %s6 = inlined_call_operand.vmem [shape: f32[1,24], index: 6, kind: input, shape index: {}]
  %s7 = inlined_call_operand.vmem [shape: f32[8,8,16], index: 7, kind: output, shape index: {0}]
  %s8 = inlined_call_operand.vmem [shape: f32[8,8], index: 8, kind: output, shape index: {1}]
  %s9 = inlined_call_operand.vmem [shape: f32[8,16], index: 9, kind: output, shape index: {2}]
  %10 = xla_tuple %s7, %s8, %s9
  %s11 = sld [smem:[#allocation0]]
  $region58: #{cross_tagger_forward.1} parent=0
    _
  %s13 = ssub.s32 1, %s11
  %s14 = scalar_select 0, %s13, %s11
  // Predicated region
  $region2: #{cross_tagger_forward.1} parent=0 // pred_check
    _
  $region3: #{cross_tagger_forward.1} parent=0 // pred_check_branch
    %16 = sbr.rel (0) target = $region5
  $region4: #{cross_tagger_forward.1} parent=0 // pred_region
    _
  $region5: #{cross_tagger_forward.1} parent=0 // pred_fallthru
    _
  // Predicated region
  $region6: #{cross_tagger_forward.1} parent=0 // pred_check
    _
  $region7: #{cross_tagger_forward.1} parent=0 // pred_check_branch
    %18 = sbr.rel (0) target = $region9
  $region8: #{cross_tagger_forward.1} parent=0 // pred_region
    _
  $region9: #{cross_tagger_forward.1} parent=0 // pred_fallthru
    _
  // Predicated region
  $region10: #{cross_tagger_forward.1} parent=0 // pred_check
    _
  $region11: #{cross_tagger_forward.1} parent=0 // pred_check_branch
    %20 = sbr.rel (0) target = $region13
  $region12: #{cross_tagger_forward.1} parent=0 // pred_region
    _
  $region13: #{cross_tagger_forward.1} parent=0 // pred_fallthru
    _
  // Predicated region
  $region14: #{cross_tagger_forward.1} parent=0 // pred_check
    _
  $region15: #{cross_tagger_forward.1} parent=0 // pred_check_branch
    %22 = sbr.rel (0) target = $region17
  $region16: #{cross_tagger_forward.1} parent=0 // pred_region
    _
  $region17: #{cross_tagger_forward.1} parent=0 // pred_fallthru
    _
  // Predicated region
  $region18: #{cross_tagger_forward.1} parent=0 // pred_check
    _
  $region19: #{cross_tagger_forward.1} parent=0 // pred_check_branch
    %24 = sbr.rel (0) target = $region21
  $region20: #{cross_tagger_forward.1} parent=0 // pred_region
    _
  $region21: #{cross_tagger_forward.1} parent=0 // pred_fallthru
    _
  // Predicated region
  $region22: #{cross_tagger_forward.1} parent=0 // pred_check
    _
  $region23: #{cross_tagger_forward.1} parent=0 // pred_check_branch
    %26 = sbr.rel (0) target = $region25
  $region24: #{cross_tagger_forward.1} parent=0 // pred_region
    _
  $region25: #{cross_tagger_forward.1} parent=0 // pred_fallthru
    _
  // Predicated region
  $region26: #{cross_tagger_forward.1} parent=0 // pred_check
    _
  $region27: #{cross_tagger_forward.1} parent=0 // pred_check_branch
    %28 = sbr.rel (0) target = $region29
  $region28: #{cross_tagger_forward.1} parent=0 // pred_region
    _
  $region29: #{cross_tagger_forward.1} parent=0 // pred_fallthru
    _
  %p29 = scmp.eq.s32.totalorder 0, 0
  // Predicated region
  $region30: #{cross_tagger_forward.1} parent=0 // pred_check
    %p30 = pneg %p29
  $region31: #{cross_tagger_forward.1} parent=0 // pred_check_branch
    %32 = sbr.rel (%p30) target = $region33
  $region32: #{cross_tagger_forward.1} parent=0 // pred_region
    %v33 = vld [vmem:[%s0] sm:$0xff]
    %v34 = vld [vmem:[%s1] sm:$0xf]
    %v35 = vld [vmem:[%s2] sm:$0x1]
    %v37 = vperm.slane %v35, 0
    %vm39 = vcmask 31744
    %v41 = vsel %vm39, %v33, 0
    %vm43 = vcmask 1043456
    %v45 = vsel %vm43, %v34, 0
    %47 = vmatpush.msra.mxu0 0.0
    %48 = vmatpush.msra.mxu0 0.0
    %49 = vmatpush.msra.mxu0 0.0
    %50 = vmatpush.msra.mxu0 0.0
    %51 = vmatpush.msra.mxu0 0.0
    %52 = vmatpush.msra.mxu0 0.0
    %53 = vmatpush.msra.mxu0 0.0
    %54 = vmatpush.msra.mxu0 0.0
    %55 = vmatpush.msra.mxu0 0.0
    %56 = vmatpush.msra.mxu0 0.0
    %57 = vmatpush.msra.mxu0 0.0
    %58 = vmatpush.msra.mxu0 0.0
    %59 = vmatpush.msra.mxu0 0.0
    %60 = vmatpush.msra.mxu0 0.0
    %61 = vmatpush.msra.mxu0 0.0
    %62 = vmatpush.msra.mxu0 %v45
    %63 = vmatmul.f32.gmra.mxu0 %v41
    %v64 = vpop.f32.mrf.mxu0
    %v65 = vadd.f32 %v37, %v64
    %66 = vdwg.mxu0
    %v67 = vmax.f32 %v65, 0.0
    %v68 = vld [vmem:[%s3] sm:$0xff]
    %v69 = vld [vmem:[%s3 + $0x8] sm:$0xff]
    %v70 = vld [vmem:[%s3 + $0x10] sm:$0xff]
    %v71 = vld [vmem:[%s3 + $0x18] sm:$0xff]
    %v72 = vld [vmem:[%s3 + $0x20] sm:$0xff]
    %v73 = vld [vmem:[%s3 + $0x28] sm:$0xff]
    %v74 = vld [vmem:[%s3 + $0x30] sm:$0xff]
    %v75 = vld [vmem:[%s3 + $0x38] sm:$0xff]
    %v76 = vld [vmem:[%s4] sm:$0x1]
    %v78 = vperm.slane %v76, 0
    %vm80 = vcmask 523264
    %v82 = vsel %vm80, %v67, 0
    %84 = vmatpush.msra.mxu0 0.0
    %85 = vmatpush.msra.mxu0 0.0
    %86 = vmatpush.msra.mxu0 0.0
    %87 = vmatpush.msra.mxu0 0.0
    %88 = vmatpush.msra.mxu0 0.0
    %89 = vmatpush.msra.mxu0 0.0
    %90 = vmatpush.msra.mxu0 0.0
    %91 = vmatpush.msra.mxu0 0.0
    %92 = vmatpush.msra.mxu0 %v75
    %93 = vmatpush.msra.mxu0 %v74
    %94 = vmatpush.msra.mxu0 %v73
    %95 = vmatpush.msra.mxu0 %v72
    %96 = vmatpush.msra.mxu0 %v71
    %97 = vmatpush.msra.mxu0 %v70
    %98 = vmatpush.msra.mxu0 %v69
    %99 = vmatpush.msra.mxu0 %v68
    %100 = vmatmul.f32.gmra.mxu0 %v82
    %v101 = vpop.f32.mrf.mxu0
    %v102 = vadd.f32 %v78, %v101
    %103 = vdwg.mxu0
    %v104 = vld [vmem:[%s5] sm:$0xff]
    %v105 = vld [vmem:[%s5 + $0x8] sm:$0xff]
    %v106 = vld [vmem:[%s5 + $0x10] sm:$0xff]
    %v107 = vld [vmem:[%s5 + $0x18] sm:$0xff]
    %v108 = vld [vmem:[%s6] sm:$0x1]
    %v110 = vperm.slane %v108, 0
    %vm112 = vcmask 261120
    %v114 = vsel %vm112, %v102, 0
    %116 = vmatpush.msra.mxu0 0.0
    %117 = vmatpush.msra.mxu0 0.0
    %118 = vmatpush.msra.mxu0 0.0
    %119 = vmatpush.msra.mxu0 0.0
    %120 = vmatpush.msra.mxu0 0.0
    %121 = vmatpush.msra.mxu0 0.0
    %122 = vmatpush.msra.mxu0 0.0
    %123 = vmatpush.msra.mxu0 0.0
    %124 = vmatpush.msra.mxu0 0.0
    %125 = vmatpush.msra.mxu0 0.0
    %126 = vmatpush.msra.mxu0 0.0
    %127 = vmatpush.msra.mxu0 0.0
    %128 = vmatpush.msra.mxu0 %v107
    %129 = vmatpush.msra.mxu0 %v106
    %130 = vmatpush.msra.mxu0 %v105
    %131 = vmatpush.msra.mxu0 %v104
    %132 = vmatmul.f32.gmra.mxu0 %v114
    %v133 = vpop.f32.mrf.mxu0
    %v134 = vadd.f32 %v110, %v133
    %135 = vdwg.mxu0
    %v136 = vxor.u32 %v134, 2147483648
    %v137 = vmul.f32 %v136, 1.442695
    %v138 = vpow.pop %v137
    %v139 = vadd.f32 %v138, 1.0
    %v140 = vrcp.pop %v139
    %v141 = vmul.f32 %v139, %v140
    %v142 = vsub.f32 1.0, %v141
    %v143 = vmul.f32 %v140, %v142
    %v144 = vadd.f32 %v140, %v143
    %vm145 = vweird.f32 %v139
    %vm146 = vweird.f32 %v140
    %vm147 = vmor %vm145, %vm146
    %v148 = vsel %vm147, %v140, %v144
    %v149 = vand.u32 2147483647, %v139
    %vm150 = vcmp.eq.f32.partialorder %v149, 8.507059e+37
    %v151 = vand.u32 %v139, 2147483648
    %v152 = vor.u32 1.1754944e-38, %v151
    %v153 = vsel %vm150, %v152, %v148
    %v154 = vmul.f32 1.0, %v153
    %vm155 = vcmask 64512
    %156 = vst.msk [vmem:[%s8] sm:$0xff] %vm155, %v154
    %158 = vrot.lane.b32.xlu0 %v154, 120
    %v159 = vpop.permute.xlu0 %158
    %vm161 = vcmask 130048
    %162 = vst.msk [vmem:[%s9] sm:$0xff] %vm161, %v159
  $region33: #{cross_tagger_forward.1} parent=0 // pred_fallthru
    _
  %v163 = vld [vmem:[%s8] sm:$0xff]
  %v164 = vld [vmem:[%s9] sm:$0xff]
  %v165 = vperm.slane %v163, 0
  %v166 = vlaneseq
  %v167 = vshrl.u32 %v166, 7
  %169 = vset.pattern.permute.xlu0 %v167
  %170 = vperm.xlu0 %169, %v165
  %v171 = vpop.permute.xlu0 %170
  %v172 = vperm.slane %v163, 1
  %v173 = vlaneseq
  %v174 = vshrl.u32 %v173, 7
  %176 = vset.pattern.permute.xlu0 %v174
  %177 = vperm.xlu0 %176, %v172
  %v178 = vpop.permute.xlu0 %177
  %v179 = vperm.slane %v163, 2
  %v180 = vlaneseq
  %v181 = vshrl.u32 %v180, 7
  %183 = vset.pattern.permute.xlu0 %v181
  %184 = vperm.xlu0 %183, %v179
  %v185 = vpop.permute.xlu0 %184
  %v186 = vperm.slane %v163, 3
  %v187 = vlaneseq
  %v188 = vshrl.u32 %v187, 7
  %190 = vset.pattern.permute.xlu0 %v188
  %191 = vperm.xlu0 %190, %v186
  %v192 = vpop.permute.xlu0 %191
  %v193 = vperm.slane %v163, 4
  %v194 = vlaneseq
  %v195 = vshrl.u32 %v194, 7
  %197 = vset.pattern.permute.xlu0 %v195
  %198 = vperm.xlu0 %197, %v193
  %v199 = vpop.permute.xlu0 %198
  %v200 = vperm.slane %v163, 5
  %v201 = vlaneseq
  %v202 = vshrl.u32 %v201, 7
  %204 = vset.pattern.permute.xlu0 %v202
  %205 = vperm.xlu0 %204, %v200
  %v206 = vpop.permute.xlu0 %205
  %v207 = vperm.slane %v163, 6
  %v208 = vlaneseq
  %v209 = vshrl.u32 %v208, 7
  %211 = vset.pattern.permute.xlu0 %v209
  %212 = vperm.xlu0 %211, %v207
  %v213 = vpop.permute.xlu0 %212
  %v214 = vperm.slane %v163, 7
  %v215 = vlaneseq
  %v216 = vshrl.u32 %v215, 7
  %218 = vset.pattern.permute.xlu0 %v216
  %219 = vperm.xlu0 %218, %v214
  %v220 = vpop.permute.xlu0 %219
  %v222 = vrot.slane %v164, 1
  %v223 = vrot.slane %v164, 2
  %v224 = vrot.slane %v164, 3
  %v225 = vrot.slane %v164, 4
  %v226 = vrot.slane %v164, 5
  %v227 = vrot.slane %v164, 6
  %v228 = vrot.slane %v164, 7
  %v229 = vperm.slane %v164, 0
  %v230 = vperm.slane %v222, 0
  %v231 = vperm.slane %v223, 0
  %v232 = vperm.slane %v224, 0
  %v233 = vperm.slane %v225, 0
  %v234 = vperm.slane %v226, 0
  %v235 = vperm.slane %v227, 0
  %v236 = vperm.slane %v228, 0
  %v245 = vmul.f32 %v171, %v229
  %v246 = vmul.f32 %v178, %v230
  %v247 = vmul.f32 %v185, %v231
  %v248 = vmul.f32 %v192, %v232
  %v249 = vmul.f32 %v199, %v233
  %v250 = vmul.f32 %v206, %v234
  %v251 = vmul.f32 %v213, %v235
  %v252 = vmul.f32 %v220, %v236
  %vm253 = vcmask 130048
  %254 = vst.msk [vmem:[%s7] sm:$0xff] %vm253, %v245
  %255 = vst.msk [vmem:[%s7 + $0x8] sm:$0xff] %vm253, %v246
  %256 = vst.msk [vmem:[%s7 + $0x10] sm:$0xff] %vm253, %v247
  %257 = vst.msk [vmem:[%s7 + $0x18] sm:$0xff] %vm253, %v248
  %258 = vst.msk [vmem:[%s7 + $0x20] sm:$0xff] %vm253, %v249
  %259 = vst.msk [vmem:[%s7 + $0x28] sm:$0xff] %vm253, %v250
  %260 = vst.msk [vmem:[%s7 + $0x30] sm:$0xff] %vm253, %v251
  %261 = vst.msk [vmem:[%s7 + $0x38] sm:$0xff] %vm253, %v252
  // Predicated region
  $region34: #{cross_tagger_forward.1} parent=0 // pred_check
    _
  $region35: #{cross_tagger_forward.1} parent=0 // pred_check_branch
    %263 = sbr.rel (0) target = $region37
  $region36: #{cross_tagger_forward.1} parent=0 // pred_region
    _
  $region37: #{cross_tagger_forward.1} parent=0 // pred_fallthru
    _
  // Predicated region
  $region38: #{cross_tagger_forward.1} parent=0 // pred_check
    _
  $region39: #{cross_tagger_forward.1} parent=0 // pred_check_branch
    %265 = sbr.rel (0) target = $region41
  $region40: #{cross_tagger_forward.1} parent=0 // pred_region
    _
  $region41: #{cross_tagger_forward.1} parent=0 // pred_fallthru
    _
  // Predicated region
  $region42: #{cross_tagger_forward.1} parent=0 // pred_check
    _
  $region43: #{cross_tagger_forward.1} parent=0 // pred_check_branch
    %267 = sbr.rel (0) target = $region45
  $region44: #{cross_tagger_forward.1} parent=0 // pred_region
    _
  $region45: #{cross_tagger_forward.1} parent=0 // pred_fallthru
    _
  // Predicated region
  $region46: #{cross_tagger_forward.1} parent=0 // pred_check
    _
  $region47: #{cross_tagger_forward.1} parent=0 // pred_check_branch
    %269 = sbr.rel (0) target = $region49
  $region48: #{cross_tagger_forward.1} parent=0 // pred_region
    _
  $region49: #{cross_tagger_forward.1} parent=0 // pred_fallthru
    _
  // Predicated region
  $region50: #{cross_tagger_forward.1} parent=0 // pred_check
    _
  $region51: #{cross_tagger_forward.1} parent=0 // pred_check_branch
    %271 = sbr.rel (0) target = $region53
  $region52: #{cross_tagger_forward.1} parent=0 // pred_region
    _
  $region53: #{cross_tagger_forward.1} parent=0 // pred_fallthru
    _
  // Predicated region
  $region54: #{cross_tagger_forward.1} parent=0 // pred_check
    _
  $region55: #{cross_tagger_forward.1} parent=0 // pred_check_branch
    %273 = sbr.rel (0) target = $region57
  $region56: #{cross_tagger_forward.1} parent=0 // pred_region
    _
  $region57: #{cross_tagger_forward.1} parent=0 // pred_fallthru
    _

</llo_original>
